<compile_context>
chip_gen: v7x
topology: tpu7x:2x2x1
jax: 0.10.0
libtpu: 0.0.40
codegen_flags: <defaults>
</compile_context>

<pallas_src>
import functools

import jax
import jax.numpy as jnp
from jax.experimental import pallas as pl
from jax.experimental.pallas import tpu as pltpu


# -----------------------------------------------------------------------------
# Pallas kernel: one BN-row chunk of the batch per grid step.
# -----------------------------------------------------------------------------
def drsa_loss_kernel(yp_ref, y_ref, st_ref, o_ref, *, alpha):
    yp = yp_ref[...]                                   # (BN, Tp) f32
    t = y_ref[...]                                     # (BN, 1)  int32
    st = st_ref[...]                                   # (BN, 1)  int32
    BN, Tp = yp.shape

    col = jax.lax.broadcasted_iota(jnp.int32, (BN, Tp), 1)
    log1m = jnp.log(1.0 - yp)                          # padded cols -> log(1)=0

    at_t = col == t                                    # one-hot at y_i
    lt_t = col < t                                     # strictly before y_i

    p_at = jnp.sum(jnp.where(at_t, yp, 0.0), axis=1, keepdims=True)      # (BN,1)
    l_at = jnp.sum(jnp.where(at_t, log1m, 0.0), axis=1, keepdims=True)   # (BN,1)
    s_excl = jnp.sum(jnp.where(lt_t, log1m, 0.0), axis=1, keepdims=True) # sum_{j<y}
    s_incl = s_excl + l_at                                               # sum_{j<=y}

    is_event = st == 1

    # Uncensored: Lz term. (y==0 rows: s_excl is an empty sum == 0, matching the
    # reference's exclusion of those rows from sum_one_minus_log.)
    lz_row = jnp.where(is_event, -(jnp.log(p_at) + s_excl), 0.0)
    # Uncensored: L_uncensored term, cumprod rewritten as exp(sum log).
    lunc_row = jnp.where(is_event, -jnp.log(1.0 - jnp.exp(s_incl)), 0.0)
    # Censored: L_censored term.
    lcen_row = jnp.where(is_event, 0.0, -s_incl)

    contrib = alpha * lz_row + (1.0 - alpha) * (lunc_row + lcen_row)     # (BN,1)
    partial = jnp.sum(contrib, axis=0, keepdims=True)                    # (1,1)

    @pl.when(pl.program_id(0) == 0)
    def _():
        o_ref[...] = jnp.zeros_like(o_ref)

    o_ref[...] += partial


# -----------------------------------------------------------------------------
# Wrapper: padding + pallas_call (streamed over batch chunks).
# -----------------------------------------------------------------------------
def drsa_loss(y_pred, y, status, alpha=0.25, block_n=8):
    N, T = y_pred.shape
    Tp = max(128, ((T + 127) // 128) * 128)            # lane-dense time axis
    BN = max(8, ((block_n + 7) // 8) * 8)
    Np = ((N + BN - 1) // BN) * BN

    # Padded rows: y_pred=0 (log(1-0)=0), y=0, status=0 (censored) -> contribute 0.
    yp = jnp.pad(y_pred.astype(jnp.float32), ((0, Np - N), (0, Tp - T)))
    yy = jnp.pad(y.astype(jnp.int32), ((0, Np - N),)).reshape(Np, 1)
    st = jnp.pad(status.astype(jnp.int32), ((0, Np - N),)).reshape(Np, 1)

    grid = (Np // BN,)

    out = pl.pallas_call(
        functools.partial(drsa_loss_kernel, alpha=float(alpha)),
        out_shape=jax.ShapeDtypeStruct((1, 1), jnp.float32),
        grid_spec=pltpu.PrefetchScalarGridSpec(
            num_scalar_prefetch=0,
            grid=grid,
            in_specs=[
                pl.BlockSpec((BN, Tp), lambda i: (i, 0)),   # y_pred chunk
                pl.BlockSpec((BN, 1), lambda i: (i, 0)),    # y chunk
                pl.BlockSpec((BN, 1), lambda i: (i, 0)),    # status chunk
            ],
            out_specs=pl.BlockSpec((1, 1), lambda i: (0, 0)),  # resident accumulator
        ),
        compiler_params=pltpu.CompilerParams(
            dimension_semantics=("arbitrary",),   # output accumulates across grid
        ),
    )(yp, yy, st)
    return out[0, 0]


# -----------------------------------------------------------------------------
# Pure-JAX reference: same math as the PyTorch module (cumsum / cumprod / gather).
# -----------------------------------------------------------------------------
def drsa_loss_reference(y_pred, y, status, alpha=0.25):
    mask = status == 1
    y = y.astype(jnp.int32)

    p_at = jnp.take_along_axis(y_pred, y[:, None], axis=1)[:, 0]
    log1m = jnp.log(1.0 - y_pred)
    cs = jnp.cumsum(log1m, axis=1)
    cp = jnp.cumprod(1.0 - y_pred, axis=1)
    cs_at = jnp.take_along_axis(cs, y[:, None], axis=1)[:, 0]
    cp_at = jnp.take_along_axis(cp, y[:, None], axis=1)[:, 0]
    cs_prev = jnp.take_along_axis(cs, jnp.maximum(y - 1, 0)[:, None], axis=1)[:, 0]

    logs_sum = jnp.sum(jnp.where(mask, jnp.log(p_at), 0.0))
    s1ml_sum = jnp.sum(jnp.where(mask & (y != 0), cs_prev, 0.0))
    Lz = -(logs_sum + s1ml_sum)

    L_unc = -jnp.sum(jnp.where(mask, jnp.log(1.0 - cp_at), 0.0))
    L_cen = -jnp.sum(jnp.where(~mask, cs_at, 0.0))
    Lc = L_unc + L_cen
    return alpha * Lz + (1.0 - alpha) * Lc


if __name__ == "__main__":
    N, T = 16, 32                     # small: 16 samples, 32 time bins
    alpha = 0.25

    key = jax.random.PRNGKey(0)
    kp, ky, ks = jax.random.split(key, 3)
    y_pred = jax.random.uniform(kp, (N, T), jnp.float32, 0.1, 0.6)
    y = jax.random.randint(ky, (N,), 0, T, jnp.int32)
    status = jax.random.randint(ks, (N,), 0, 2, jnp.int32)

    # Make sure every branch is exercised deterministically:
    y = y.at[0].set(0)
    status = status.at[0].set(1)       # uncensored with y == 0
    status = status.at[1].set(0)       # censored
    status = status.at[2].set(1)       # uncensored with y != 0
    y = y.at[2].set(5)

    out = drsa_loss(y_pred, y, status, alpha=alpha)
    out = jax.block_until_ready(out)

    ref = drsa_loss_reference(y_pred, y, status, alpha=alpha)
    assert out.shape == ()
    assert jnp.allclose(out, ref, rtol=1e-3, atol=1e-3), (
        f"kernel={float(out)} ref={float(ref)} abs_err={float(jnp.abs(out - ref))}")

    print("KERNEL_OK")
</pallas_src>

<mosaic_0001>
module attributes {stable_mosaic.version = 11 : i64} {
  func.func @drsa_loss_kernel(%arg0: i32, %arg1: memref<8x128xf32, #tpu.memory_space<vmem>>, %arg2: memref<8x1xi32, #tpu.memory_space<vmem>>, %arg3: memref<8x1xi32, #tpu.memory_space<vmem>>, %arg4: memref<1x1xf32, #tpu.memory_space<vmem>>) attributes {dimension_semantics = [#tpu.dimension_semantics<arbitrary>], iteration_bounds = array<i64: 2>, scalar_prefetch = 0 : i64, scratch_operands = 0 : i64, tpu.core_type = #tpu.core_type<tc>, window_params = [{transform_indices = @transform_0, window_bounds = array<i64: 8, 128>}, {transform_indices = @transform_1, window_bounds = array<i64: 8, 1>}, {transform_indices = @transform_2, window_bounds = array<i64: 8, 1>}, {pipeline_mode = #tpu.pipeline_mode<synchronous>, transform_indices = @transform_3, window_bounds = array<i64: 1, 1>}]} {
    %c0 = arith.constant 0 : index
    %c0_0 = arith.constant 0 : index
    %0 = vector.load %arg1[%c0, %c0_0] : memref<8x128xf32, #tpu.memory_space<vmem>>, vector<8x128xf32>
    %c0_1 = arith.constant 0 : index
    %c0_2 = arith.constant 0 : index
    %1 = vector.load %arg2[%c0_1, %c0_2] : memref<8x1xi32, #tpu.memory_space<vmem>>, vector<8x1xi32>
    %c0_3 = arith.constant 0 : index
    %c0_4 = arith.constant 0 : index
    %2 = vector.load %arg3[%c0_3, %c0_4] : memref<8x1xi32, #tpu.memory_space<vmem>>, vector<8x1xi32>
    %3 = tpu.iota {dimensions = array<i32: 1>} : vector<8x128xi32>
    %cst = arith.constant 1.000000e+00 : f32
    %4 = vector.broadcast %cst : f32 to vector<8x128xf32>
    %5 = arith.subf %4, %0 : vector<8x128xf32>
    %6 = math.log %5 : vector<8x128xf32>
    %7 = vector.broadcast %1 : vector<8x1xi32> to vector<8x128xi32>
    %8 = arith.cmpi eq, %3, %7 : vector<8x128xi32>
    %9 = vector.broadcast %1 : vector<8x1xi32> to vector<8x128xi32>
    %10 = arith.cmpi slt, %3, %9 : vector<8x128xi32>
    %cst_5 = arith.constant 0.000000e+00 : f32
    %11 = vector.broadcast %cst_5 : f32 to vector<8x128xf32>
    %12 = arith.select %8, %0, %11 : vector<8x128xi1>, vector<8x128xf32>
    %cst_6 = arith.constant dense<0.000000e+00> : vector<8xf32>
    %13 = vector.multi_reduction <add>, %12, %cst_6 [1] : vector<8x128xf32> to vector<8xf32>
    %14 = vector.shape_cast %13 : vector<8xf32> to vector<8x1xf32>
    %cst_7 = arith.constant 0.000000e+00 : f32
    %15 = vector.broadcast %cst_7 : f32 to vector<8x128xf32>
    %16 = arith.select %8, %6, %15 : vector<8x128xi1>, vector<8x128xf32>
    %cst_8 = arith.constant dense<0.000000e+00> : vector<8xf32>
    %17 = vector.multi_reduction <add>, %16, %cst_8 [1] : vector<8x128xf32> to vector<8xf32>
    %18 = vector.shape_cast %17 : vector<8xf32> to vector<8x1xf32>
    %cst_9 = arith.constant 0.000000e+00 : f32
    %19 = vector.broadcast %cst_9 : f32 to vector<8x128xf32>
    %20 = arith.select %10, %6, %19 : vector<8x128xi1>, vector<8x128xf32>
    %cst_10 = arith.constant dense<0.000000e+00> : vector<8xf32>
    %21 = vector.multi_reduction <add>, %20, %cst_10 [1] : vector<8x128xf32> to vector<8xf32>
    %22 = vector.shape_cast %21 : vector<8xf32> to vector<8x1xf32>
    %23 = arith.addf %22, %18 : vector<8x1xf32>
    %c1_i32 = arith.constant 1 : i32
    %24 = vector.broadcast %c1_i32 : i32 to vector<8x1xi32>
    %25 = arith.cmpi eq, %2, %24 : vector<8x1xi32>
    %26 = math.log %14 : vector<8x1xf32>
    %27 = arith.addf %26, %22 : vector<8x1xf32>
    %cst_11 = arith.constant 0.000000e+00 : f32
    %28 = vector.broadcast %cst_11 : f32 to vector<8x1xf32>
    %29 = arith.subf %28, %27 : vector<8x1xf32>
    %cst_12 = arith.constant 0.000000e+00 : f32
    %30 = vector.broadcast %cst_12 : f32 to vector<8x1xf32>
    %31 = arith.select %25, %29, %30 : vector<8x1xi1>, vector<8x1xf32>
    %32 = math.exp %23 : vector<8x1xf32>
    %cst_13 = arith.constant 1.000000e+00 : f32
    %33 = vector.broadcast %cst_13 : f32 to vector<8x1xf32>
    %34 = arith.subf %33, %32 : vector<8x1xf32>
    %35 = math.log %34 : vector<8x1xf32>
    %cst_14 = arith.constant 0.000000e+00 : f32
    %36 = vector.broadcast %cst_14 : f32 to vector<8x1xf32>
    %37 = arith.subf %36, %35 : vector<8x1xf32>
    %cst_15 = arith.constant 0.000000e+00 : f32
    %38 = vector.broadcast %cst_15 : f32 to vector<8x1xf32>
    %39 = arith.select %25, %37, %38 : vector<8x1xi1>, vector<8x1xf32>
    %cst_16 = arith.constant 0.000000e+00 : f32
    %40 = vector.broadcast %cst_16 : f32 to vector<8x1xf32>
    %41 = arith.subf %40, %23 : vector<8x1xf32>
    %cst_17 = arith.constant 0.000000e+00 : f32
    %42 = vector.broadcast %cst_17 : f32 to vector<8x1xf32>
    %43 = arith.select %25, %42, %41 : vector<8x1xi1>, vector<8x1xf32>
    %cst_18 = arith.constant 2.500000e-01 : f32
    %44 = vector.broadcast %cst_18 : f32 to vector<8x1xf32>
    %45 = arith.mulf %44, %31 : vector<8x1xf32>
    %46 = arith.addf %39, %43 : vector<8x1xf32>
    %cst_19 = arith.constant 7.500000e-01 : f32
    %47 = vector.broadcast %cst_19 : f32 to vector<8x1xf32>
    %48 = arith.mulf %47, %46 : vector<8x1xf32>
    %49 = arith.addf %45, %48 : vector<8x1xf32>
    %cst_20 = arith.constant dense<0.000000e+00> : vector<1xf32>
    %50 = vector.multi_reduction <add>, %49, %cst_20 [0] : vector<8x1xf32> to vector<1xf32>
    %51 = vector.shape_cast %50 : vector<1xf32> to vector<1x1xf32>
    %c0_i32 = arith.constant 0 : i32
    %52 = arith.cmpi eq, %arg0, %c0_i32 : i32
    %53 = arith.extui %52 : i1 to i32
    %c0_i32_21 = arith.constant 0 : i32
    %54 = arith.cmpi ne, %53, %c0_i32_21 : i32
    scf.if %54 {
      %cst_26 = arith.constant 0.000000e+00 : f32
      %58 = vector.broadcast %cst_26 : f32 to vector<1x1xf32>
      %c0_27 = arith.constant 0 : index
      %c0_28 = arith.constant 0 : index
      %59 = vector.load %arg4[%c0_27, %c0_28] : memref<1x1xf32, #tpu.memory_space<vmem>>, vector<1x1xf32>
      tpu.vector_store %arg4[%c0_27, %c0_28], %58 {strides = array<i32>} : memref<1x1xf32, #tpu.memory_space<vmem>>, vector<1x1xf32>,
    } else {
    }
    %c0_22 = arith.constant 0 : index
    %c0_23 = arith.constant 0 : index
    %55 = vector.load %arg4[%c0_22, %c0_23] : memref<1x1xf32, #tpu.memory_space<vmem>>, vector<1x1xf32>
    %56 = arith.addf %55, %51 : vector<1x1xf32>
    %c0_24 = arith.constant 0 : index
    %c0_25 = arith.constant 0 : index
    %57 = vector.load %arg4[%c0_24, %c0_25] : memref<1x1xf32, #tpu.memory_space<vmem>>, vector<1x1xf32>
    tpu.vector_store %arg4[%c0_24, %c0_25], %56 {strides = array<i32>} : memref<1x1xf32, #tpu.memory_space<vmem>>, vector<1x1xf32>,
    return
  }
  func.func @transform_0(%arg0: i32) -> (i32, i32) {
    %c0_i32 = arith.constant 0 : i32
    %c0_i32_0 = arith.constant 0 : i32
    return %arg0, %c0_i32 : i32, i32
  }
  func.func @transform_1(%arg0: i32) -> (i32, i32) {
    %c0_i32 = arith.constant 0 : i32
    %c0_i32_0 = arith.constant 0 : i32
    return %arg0, %c0_i32 : i32, i32
  }
  func.func @transform_2(%arg0: i32) -> (i32, i32) {
    %c0_i32 = arith.constant 0 : i32
    %c0_i32_0 = arith.constant 0 : i32
    return %arg0, %c0_i32 : i32, i32
  }
  func.func @transform_3(%arg0: i32) -> (i32, i32) {
    %c0_i32 = arith.constant 0 : i32
    %c0_i32_0 = arith.constant 0 : i32
    %c0_i32_1 = arith.constant 0 : i32
    return %c0_i32, %c0_i32_0 : i32, i32
  }
}

</mosaic_0001>

<llo_original>
// kernel: tpu_custom_call.1
$region0: #{tpu_custom_call.1}
  #allocation0 [shape = 'u32[]', space=smem, size = 0x4, offset = 0x4, fixed_abs, tag = 'smem constant byte address 0x4 - core index']
  #allocation1 [shape = 'u32[144,128]{1,0:T(1,128)}', space=vmem, size = 0x12000, scoped, tag = 'internal scratch']
  %s0 = inlined_call_operand.vmem [shape: f32[16,128], index: 0, kind: input, shape index: {}]
  %s1 = inlined_call_operand.vmem [shape: s32[16,1], index: 1, kind: input, shape index: {}]
  %s2 = inlined_call_operand.vmem [shape: s32[16,1], index: 2, kind: input, shape index: {}]
  %s3 = inlined_call_operand.hbm [shape: f32[1,1], index: 3, kind: output, shape index: {}]
  %s4 = sld [smem:[#allocation0]]
  $region49: #{tpu_custom_call.1} parent=0
    _
  %s6 = ssub.s32 1, %s4
  %s7 = scalar_select 0, %s6, %s4
  $region1: #{tpu_custom_call.1} parent=0
    #allocation2 [shape = 'u8[512]{0}', space=vmem, size = 0x400, scoped, tag = 'output window, operand 0, single buffered']
    #allocation3 [shape = 's32[2]{0}', space=sflag, size = 0x8, scoped, tag = 'scoped memory for tpu_custom_call.1']
    %8 = vsyncpa [#allocation3], 0
    loop: start=0, step=1, limit=4
    $region2: #{tpu_custom_call.1} parent=1 // loop_pre_header
      _
    $region3: #{tpu_custom_call.1} parent=1 // loop_header
      %s10 = sphi 0, %s14
      %p11 = scmp.ge.s32.totalorder %s10, 4
      %s20 = sphi 0, %s22
      %s23 = sphi 0, %s20
      %s24 = sphi 0, %s23
      %s40 = sphi 0, %s24
      %s46 = sphi 0, %s48
      %s49 = sphi 0, %s46
      %s50 = sphi 0, %s49
      %s66 = sphi 0, %s50
      %s72 = sphi 0, %s74
      %s75 = sphi 0, %s72
      %s76 = sphi 0, %s75
      %s92 = sphi 0, %s76
      %s96 = sphi 0, %s96
      %s98 = sphi 0, %s96
      %s99 = sphi 0, %s98
      %s113 = sphi 0, %s99
    $region4: #{tpu_custom_call.1} parent=1 // loop_header_branch
      %13 = sbr.rel (%p11) target = $region8
    $region5: #{tpu_custom_call.1} parent=1 // loop_body
      %s15 = ssub.s32 %s10, 1
      %s16 = ssub.s32 %s10, 2
      %s17 = sadd.s32 %s10, 1
      %s18 = ssub.s32 %s10, %s17
      %p19 = scmp.eq.s32.totalorder %s18, 0
      %s21 = sadd.s32 %s20, 1
      %s22 = scalar_select %p19, %s20, %s21
      %p25 = pneg %p19
      %p26 = scmp.eq.s32.totalorder %s10, 1
      %p27 = por %p25, %p26
      %p28 = scmp.ne.s32.totalorder %s20, %s23
      %p29 = scmp.eq.s32.totalorder %s10, 0
      %p30 = por %p28, %p29
      %p31 = scmp.ne.s32.totalorder %s20, %s23
      %p32 = scmp.eq.s32.totalorder %s15, 1
      %p33 = por %p31, %p32
      %p34 = scmp.ne.s32.totalorder %s23, %s24
      %p35 = scmp.eq.s32.totalorder %s15, 0
      %p36 = por %p34, %p35
      %p37 = scmp.ne.s32.totalorder %s23, %s24
      %p38 = scmp.eq.s32.totalorder %s16, 1
      %p39 = por %p37, %p38
      %p41 = scmp.ne.s32.totalorder %s24, %s40
      %p42 = scmp.eq.s32.totalorder %s16, 0
      %p43 = por %p41, %p42
      %s44 = ssub.s32 %s10, %s17
      %p45 = scmp.eq.s32.totalorder %s44, 0
      %s47 = sadd.s32 %s46, 1
      %s48 = scalar_select %p45, %s46, %s47
      %p51 = pneg %p45
      %p52 = scmp.eq.s32.totalorder %s10, 1
      %p53 = por %p51, %p52
      %p54 = scmp.ne.s32.totalorder %s46, %s49
      %p55 = scmp.eq.s32.totalorder %s10, 0
      %p56 = por %p54, %p55
      %p57 = scmp.ne.s32.totalorder %s46, %s49
      %p58 = scmp.eq.s32.totalorder %s15, 1
      %p59 = por %p57, %p58
      %p60 = scmp.ne.s32.totalorder %s49, %s50
      %p61 = scmp.eq.s32.totalorder %s15, 0
      %p62 = por %p60, %p61
      %p63 = scmp.ne.s32.totalorder %s49, %s50
      %p64 = scmp.eq.s32.totalorder %s16, 1
      %p65 = por %p63, %p64
      %p67 = scmp.ne.s32.totalorder %s50, %s66
      %p68 = scmp.eq.s32.totalorder %s16, 0
      %p69 = por %p67, %p68
      %s70 = ssub.s32 %s10, %s17
      %p71 = scmp.eq.s32.totalorder %s70, 0
      %s73 = sadd.s32 %s72, 1
      %s74 = scalar_select %p71, %s72, %s73
      %p77 = pneg %p71
      %p78 = scmp.eq.s32.totalorder %s10, 1
      %p79 = por %p77, %p78
      %p80 = scmp.ne.s32.totalorder %s72, %s75
      %p81 = scmp.eq.s32.totalorder %s10, 0
      %p82 = por %p80, %p81
      %p83 = scmp.ne.s32.totalorder %s72, %s75
      %p84 = scmp.eq.s32.totalorder %s15, 1
      %p85 = por %p83, %p84
      %p86 = scmp.ne.s32.totalorder %s75, %s76
      %p87 = scmp.eq.s32.totalorder %s15, 0
      %p88 = por %p86, %p87
      %p89 = scmp.ne.s32.totalorder %s75, %s76
      %p90 = scmp.eq.s32.totalorder %s16, 1
      %p91 = por %p89, %p90
      %p93 = scmp.ne.s32.totalorder %s76, %s92
      %p94 = scmp.eq.s32.totalorder %s16, 0
      %p95 = por %p93, %p94
      %s97 = sadd.s32 %s96, 1
      %p100 = scmp.eq.s32.totalorder %s10, 1
      %p101 = scmp.ne.s32.totalorder %s96, %s98
      %p102 = scmp.eq.s32.totalorder %s10, 0
      %p103 = por %p101, %p102
      %p104 = scmp.ne.s32.totalorder %s96, %s98
      %p105 = scmp.eq.s32.totalorder %s15, 1
      %p106 = por %p104, %p105
      %p107 = scmp.ne.s32.totalorder %s98, %s99
      %p108 = scmp.eq.s32.totalorder %s15, 0
      %p109 = por %p107, %p108
      %p110 = scmp.ne.s32.totalorder %s98, %s99
      %p111 = scmp.eq.s32.totalorder %s16, 1
      %p112 = por %p110, %p111
      %p114 = scmp.ne.s32.totalorder %s99, %s113
      %p115 = scmp.eq.s32.totalorder %s16, 0
      %p116 = por %p114, %p115
      %p117 = scmp.le.s32.totalorder 1, %s10
      %p118 = scmp.lt.s32.totalorder %s10, 3
      %p119 = pnand %p117, %p118
      %p120 = pneg %p119
      // Predicated region
      $region9: #{tpu_custom_call.1} parent=5 // pred_check
        _
      $region10: #{tpu_custom_call.1} parent=5 // pred_check_branch
        %122 = sbr.rel (%p119) target = $region12
      $region11: #{tpu_custom_call.1} parent=5 // pred_region
        %s123 = ssub.s32 %s10, 1
      $region12: #{tpu_custom_call.1} parent=5 // pred_fallthru
        _
      %p124 = scmp.lt.s32.totalorder %s10, 2
      // Predicated region
      $region13: #{tpu_custom_call.1} parent=5 // pred_check
        %p125 = pneg %p124
      $region14: #{tpu_custom_call.1} parent=5 // pred_check_branch
        %127 = sbr.rel (%p125) target = $region16
      $region15: #{tpu_custom_call.1} parent=5 // pred_region
        // Predicated region
        $region17: #{tpu_custom_call.1} parent=15 // pred_check
          %p128 = pneg %p30
        $region18: #{tpu_custom_call.1} parent=15 // pred_check_branch
          %130 = sbr.rel (%p128) target = $region20
        $region19: #{tpu_custom_call.1} parent=15 // pred_region
          %p131 = scmp.lt.s32.totalorder %s10, 1
          %s132 = scalar_select %p131, %s10, 1
          %s133 = smul.addr %s132, 8
          %s134 = scalar_lea.vmem %s0, %s133
        $region20: #{tpu_custom_call.1} parent=15 // pred_fallthru
          _
        // Predicated region
        $region21: #{tpu_custom_call.1} parent=15 // pred_check
          %p135 = pneg %p56
        $region22: #{tpu_custom_call.1} parent=15 // pred_check_branch
          %137 = sbr.rel (%p135) target = $region24
        $region23: #{tpu_custom_call.1} parent=15 // pred_region
          %p138 = scmp.lt.s32.totalorder %s10, 1
          %s139 = scalar_select %p138, %s10, 1
          %s140 = smul.addr %s139, 8
          %s141 = scalar_lea.vmem %s1, %s140
        $region24: #{tpu_custom_call.1} parent=15 // pred_fallthru
          _
        // Predicated region
        $region25: #{tpu_custom_call.1} parent=15 // pred_check
          %p142 = pneg %p82
        $region26: #{tpu_custom_call.1} parent=15 // pred_check_branch
          %144 = sbr.rel (%p142) target = $region28
        $region27: #{tpu_custom_call.1} parent=15 // pred_region
          %p145 = scmp.lt.s32.totalorder %s10, 1
          %s146 = scalar_select %p145, %s10, 1
          %s147 = smul.addr %s146, 8
          %s148 = scalar_lea.vmem %s2, %s147
        $region28: #{tpu_custom_call.1} parent=15 // pred_fallthru
          _
      $region16: #{tpu_custom_call.1} parent=5 // pred_fallthru
        _
      %p149 = scmp.le.s32.totalorder 1, %s10
      %p150 = scmp.lt.s32.totalorder %s10, 3
      %p151 = pnand %p149, %p150
      %p152 = pneg %p151
      // Predicated region
      $region29: #{tpu_custom_call.1} parent=5 // pred_check
        _
      $region30: #{tpu_custom_call.1} parent=5 // pred_check_branch
        %154 = sbr.rel (%p151) target = $region32
      $region31: #{tpu_custom_call.1} parent=5 // pred_region
        %s155 = ssub.s32 %s10, 1
        %p156 = scmp.lt.s32.totalorder %s15, 1
        %s157 = scalar_select %p156, %s15, 1
        %s158 = smul.addr %s157, 8
        %s159 = scalar_lea.vmem %s0, %s158
        %p160 = pneg %p36
        %p161 = pneg %p33
        %p162 = scmp.lt.s32.totalorder %s15, 1
        %s163 = scalar_select %p162, %s15, 1
        %s164 = smul.addr %s163, 8
        %s165 = scalar_lea.vmem %s1, %s164
        %p166 = pneg %p62
        %p167 = pneg %p59
        %p168 = scmp.lt.s32.totalorder %s15, 1
        %s169 = scalar_select %p168, %s15, 1
        %s170 = smul.addr %s169, 8
        %s171 = scalar_lea.vmem %s2, %s170
        %p172 = pneg %p88
        %p173 = pneg %p85
        %p174 = pneg %p109
        %p175 = pneg %p106
        %p176 = scmp.lt.s32.totalorder %s15, 1
        %s177 = scalar_select %p176, %s15, 1
        %s178 = smul.addr %s177, 8
        %s179 = scalar_lea.vmem %s0, %s178
        %p180 = scmp.lt.s32.totalorder %s15, 1
        %s181 = scalar_select %p180, %s15, 1
        %s182 = smul.addr %s181, 8
        %s183 = scalar_lea.vmem %s1, %s182
        %p184 = scmp.lt.s32.totalorder %s15, 1
        %s185 = scalar_select %p184, %s15, 1
        %s186 = smul.addr %s185, 8
        %s187 = scalar_lea.vmem %s2, %s186
        %v188 = vld [vmem:[%s179] sm:$0xff]
        %v189 = vld [vmem:[%s183] sm:$0xff]
        %v190 = vld [vmem:[%s187] sm:$0xff]
        %v191 = vlaneseq
        %v192 = vand.u32 %v191, 127
        %v193 = vsub.f32 1.0, %v188
        %v194 = vlog2.pop %v193
        %v195 = vmul.f32 %v194, 0.6931472
        %196 = vset.pattern.permute.xlu0 0
        %197 = vperm.xlu0 %196, %v189
        %v198 = vpop.permute.xlu0 %197
        %vm199 = vcmp.eq.s32.totalorder %v192, %v198
        %vm200 = vcmp.lt.s32.totalorder %v192, %v198
        %v201 = vsel %vm199, %v188, 0.0
        %202 = vadd.xlane.f32.xlu0 %v201
        %v203 = vpop.xlane.xlu0 %202
        %v204 = vsel %vm199, %v195, 0.0
        %205 = vadd.xlane.f32.xlu0 %v204
        %v206 = vpop.xlane.xlu0 %205
        %v207 = vsel %vm200, %v195, 0.0
        %208 = vadd.xlane.f32.xlu0 %v207
        %v209 = vpop.xlane.xlu0 %208
        %v210 = vadd.f32 %v209, %v206
        %vm211 = vcmp.eq.s32.totalorder %v190, 1
        %v212 = vlog2.pop %v203
        %v213 = vmul.f32 %v212, 0.6931472
        %v214 = vadd.f32 %v213, %v209
        %v215 = vsub.f32 0.0, %v214
        %v216 = vsel %vm211, %v215, 0.0
        %v217 = vmul.f32 %v210, 1.442695
        %v218 = vpow.pop %v217
        %v219 = vsub.f32 1.0, %v218
        %v220 = vlog2.pop %v219
        %v221 = vmul.f32 %v220, 0.6931472
        %v222 = vsub.f32 0.0, %v221
        %v223 = vsel %vm211, %v222, 0.0
        %v224 = vsub.f32 0.0, %v210
        %v225 = vsel %vm211, 0.0, %v224
        %v226 = vmul.f32 %v216, 0.25
        %v227 = vadd.f32 %v223, %v225
        %v228 = vmul.f32 %v227, 0.75
        %v229 = vadd.f32 %v226, %v228
        %vm230 = vcmask 7168
        %v231 = vsel %vm230, %v229, 0.0
        %v232 = vrot.slane %v231, 4
        %v233 = vadd.f32 %v231, %v232
        %v234 = vrot.slane %v233, 2
        %v235 = vadd.f32 %v233, %v234
        %v236 = vrot.slane %v235, 1
        %v237 = vadd.f32 %v235, %v236
        %p238 = scmp.eq.s32.totalorder %s15, 0
        // Predicated region
        $region33: #{tpu_custom_call.1} parent=31 // pred_check
          %p239 = pneg %p238
        $region34: #{tpu_custom_call.1} parent=31 // pred_check_branch
          %241 = sbr.rel (%p239) target = $region36
        $region35: #{tpu_custom_call.1} parent=31 // pred_region
          %vm242 = vcmask 0
          %243 = vst.msk [vmem:[#allocation2] sm:$0x1] %vm242, 0.0
        $region36: #{tpu_custom_call.1} parent=31 // pred_fallthru
          _
        %v244 = vld [vmem:[#allocation2] sm:$0x1]
        %v245 = vadd.f32 %v244, %v237
        %vm246 = vcmask 0
        %247 = vst.msk [vmem:[#allocation2] sm:$0x1] %vm246, %v245
        // Predicated region
        $region37: #{tpu_custom_call.1} parent=31 // pred_check
          %p248 = pneg %p106
        $region38: #{tpu_custom_call.1} parent=31 // pred_check_branch
          %250 = sbr.rel (%p248) target = $region40
        $region39: #{tpu_custom_call.1} parent=31 // pred_region
          %s252 = ssub.s32 16, 16
          %253 = vsyncadd [#allocation3], %s252
          %s255 = sshll.u32 [#allocation2], 4
          %s256 = int_to_ptr.vmem [resolvable:$true] %s255
          %258 = dma.vmem_to_hbm [thread:$0]  %s256, 16, %s3, [#allocation3]
        $region40: #{tpu_custom_call.1} parent=31 // pred_fallthru
          _
        // Predicated region
        $region41: #{tpu_custom_call.1} parent=31 // pred_check
          %p259 = pneg %p106
        $region42: #{tpu_custom_call.1} parent=31 // pred_check_branch
          %261 = sbr.rel (%p259) target = $region44
        $region43: #{tpu_custom_call.1} parent=31 // pred_region
          %262 = dma.done [#allocation3], 16
        $region44: #{tpu_custom_call.1} parent=31 // pred_fallthru
          _
      $region32: #{tpu_custom_call.1} parent=5 // pred_fallthru
        _
      %p263 = scmp.le.s32.totalorder 2, %s10
      // Predicated region
      $region45: #{tpu_custom_call.1} parent=5 // pred_check
        %p264 = pneg %p263
      $region46: #{tpu_custom_call.1} parent=5 // pred_check_branch
        %266 = sbr.rel (%p264) target = $region48
      $region47: #{tpu_custom_call.1} parent=5 // pred_region
        %s267 = ssub.s32 %s10, 2
      $region48: #{tpu_custom_call.1} parent=5 // pred_fallthru
        _
    $region6: #{tpu_custom_call.1} parent=1 // loop_footer
      %s14 = sadd.s32 1, %s10
    $region7: #{tpu_custom_call.1} parent=1 // loop_footer_branch
      %9 = sbr.rel target = $region3
    $region8: #{tpu_custom_call.1} parent=1 // loop_exit
      _
    %268 = vsyncpa [#allocation3], 1
    %s269 = scalar_lea.sflag [#allocation3], 1
    %270 = vsyncpa %s269, 1

</llo_original>
